<compile_context>
chip_gen: v6e
topology: v6e:2x2x1
jax: 0.10.0
libtpu: 0.0.40
codegen_flags: <defaults>
</compile_context>

<pallas_src>
import jax
import jax.numpy as jnp
from jax.experimental import pallas as pl
from jax.experimental.pallas import tpu as pltpu


def _round_up(n: int, m: int) -> int:
    return ((n + m - 1) // m) * m


def _fused_linear_kernel(x_ref, w_ref, b_ref, o_ref):
    # Single MXU matmul (f32 accumulate) + lane-broadcast bias add, unpadded store.
    o_ref[...] = (
        jnp.dot(x_ref[...], w_ref[...], preferred_element_type=jnp.float32)
        + b_ref[...]
    ).astype(o_ref.dtype)


def make_output_net_2(w1, b1, w2, b2, *, block_b=2048, min_pallas_batch=1024):
    """Build the Output_net_2 forward: y = (x @ w1 + b1) @ w2 + b2.

    The two bias-only linears are folded once here (exact up to fp rounding):
        W = w1 @ w2   ([D, C]),    b = b1 @ w2 + b2   ([C])
    so the per-call kernel is a single x @ W + b matmul.

    Weights are stored transposed vs. torch nn.Linear (math is x @ W + b).
    """
    hi = jax.lax.Precision.HIGHEST  # fold runs once at init; pay for full f32 accuracy
    w = jnp.dot(w1, w2, precision=hi).astype(jnp.float32)                 # [D, C]
    b = (jnp.dot(b1, w2, precision=hi) + b2).astype(jnp.float32)          # [C]
    b2d = b[None, :]                                                      # [1, C]
    D, C = w.shape

    def forward(x, *, force_pallas=False):
        B = x.shape[0]

        # Small-batch fast path: a single fused XLA op beats kernel launch overhead.
        if B < min_pallas_batch and not force_pallas:
            return x @ w + b

        # --- batch tiling: sublane-aligned tile on a 'parallel' grid axis ---
        TB = min(block_b, _round_up(B, 8))
        # Guarantee >=2 grid steps on non-trivial batches so v7x's 2nd TensorCore
        # gets work (v5e/v6e are single-TC; extra steps are near-free there).
        if B > 16 and pl.cdiv(B, TB) < 2:
            TB = max(8, _round_up(pl.cdiv(B, 2), 8))
        grid = (pl.cdiv(B, TB),)  # ragged last block: padded reads, masked writes

        # Scoped-VMEM headroom only when needed (v5e default is 16 MiB).
        vmem_bytes = 2 * TB * (D + C) * 4 + (D * C + C) * 4
        cp = dict(dimension_semantics=("parallel",))
        if vmem_bytes > 12 * 1024 * 1024:
            cp["vmem_limit_bytes"] = min(100 * 1024 * 1024, int(vmem_bytes * 2))

        return pl.pallas_call(
            _fused_linear_kernel,
            out_shape=jax.ShapeDtypeStruct((B, C), jnp.float32),
            grid=grid,
            in_specs=[
                pl.BlockSpec((TB, D), lambda i: (i, 0)),   # x tile (batch-indexed)
                pl.BlockSpec((D, C), lambda i: (0, 0)),    # folded weight (replicated)
                pl.BlockSpec((1, C), lambda i: (0, 0)),    # folded bias (replicated)
            ],
            out_specs=pl.BlockSpec((TB, C), lambda i: (i, 0)),  # unpadded [B, C] store
            compiler_params=pltpu.CompilerParams(**cp),
        )(x, w, b2d)

    return forward


def init_params(key, input_size, hidden_dim, out_class):
    """Deterministic parameter init mirroring nn.Linear shapes (PyTorch-style uniform)."""
    k1, k2, k3, k4 = jax.random.split(key, 4)
    h2 = hidden_dim * 2
    bound1 = 1.0 / (input_size ** 0.5)
    bound2 = 1.0 / (h2 ** 0.5)
    # stored transposed vs. torch's [out, in] so the math is x @ W directly
    w1 = jax.random.uniform(k1, (input_size, h2), jnp.float32, -bound1, bound1)
    b1 = jax.random.uniform(k2, (h2,), jnp.float32, -bound1, bound1)
    w2 = jax.random.uniform(k3, (h2, out_class), jnp.float32, -bound2, bound2)
    b2 = jax.random.uniform(k4, (out_class,), jnp.float32, -bound2, bound2)
    return w1, b1, w2, b2


if __name__ == "__main__":
    # shapes consistent with the module's forward:
    # input_size=32, args.hidden_layer=16 -> hidden*2=32, args.out_class_1=4, batch=8
    batch, input_size, hidden_dim, out_class = 8, 32, 16, 4

    key = jax.random.PRNGKey(0)
    kx, kp, kx2 = jax.random.split(key, 3)
    x = jax.random.normal(kx, (batch, input_size), dtype=jnp.float32)
    w1, b1, w2, b2 = init_params(kp, input_size, hidden_dim, out_class)

    forward = make_output_net_2(w1, b1, w2, b2)

    # --- exercise the Pallas path at the module's native tiny batch ---
    out = jax.block_until_ready(forward(x, force_pallas=True))
    ref = (x @ w1 + b1) @ w2 + b2
    assert out.shape == (batch, out_class)
    assert jnp.allclose(out, ref, atol=1e-4, rtol=1e-4), \
        f"max abs err = {jnp.max(jnp.abs(out - ref))}"

    # --- small-batch XLA fast path gives the same answer ---
    out_fast = jax.block_until_ready(forward(x))
    assert jnp.allclose(out_fast, ref, atol=1e-4, rtol=1e-4)

    # --- moderate batch: >=2 grid steps + ragged last block (masked writeback) ---
    xb = jax.random.normal(kx2, (200, input_size), dtype=jnp.float32)
    outb = jax.block_until_ready(forward(xb, force_pallas=True))
    refb = (xb @ w1 + b1) @ w2 + b2
    assert outb.shape == (200, out_class)
    assert jnp.allclose(outb, refb, atol=1e-4, rtol=1e-4), \
        f"max abs err = {jnp.max(jnp.abs(outb - refb))}"

    print("KERNEL_OK")
</pallas_src>

<mosaic_0001>
module attributes {stable_mosaic.version = 11 : i64} {
  func.func @_fused_linear_kernel(%arg0: i32, %arg1: memref<8x32xf32, #tpu.memory_space<vmem>>, %arg2: memref<32x4xf32, #tpu.memory_space<vmem>>, %arg3: memref<1x4xf32, #tpu.memory_space<vmem>>, %arg4: memref<8x4xf32, #tpu.memory_space<vmem>>) attributes {dimension_semantics = [#tpu.dimension_semantics<parallel>], iteration_bounds = array<i64: 1>, scalar_prefetch = 0 : i64, scratch_operands = 0 : i64, tpu.core_type = #tpu.core_type<tc>, window_params = [{transform_indices = @transform_0, window_bounds = array<i64: 8, 32>}, {pipeline_mode = #tpu.pipeline_mode<synchronous>, transform_indices = @transform_1, window_bounds = array<i64: 32, 4>}, {pipeline_mode = #tpu.pipeline_mode<synchronous>, transform_indices = @transform_2, window_bounds = array<i64: 1, 4>}, {transform_indices = @transform_3, window_bounds = array<i64: 8, 4>}]} {
    %c0 = arith.constant 0 : index
    %c0_0 = arith.constant 0 : index
    %0 = vector.load %arg1[%c0, %c0_0] : memref<8x32xf32, #tpu.memory_space<vmem>>, vector<8x32xf32>
    %c0_1 = arith.constant 0 : index
    %c0_2 = arith.constant 0 : index
    %1 = vector.load %arg2[%c0_1, %c0_2] : memref<32x4xf32, #tpu.memory_space<vmem>>, vector<32x4xf32>
    %cst = arith.constant dense<0.000000e+00> : vector<8x4xf32>
    %2 = tpu.matmul %0, %1, %cst {dimension_numbers = #tpu.dot_dimension_numbers<[1], [0], [0], [1], [0, 0, 1, 1], [], []>} : vector<8x32xf32>, vector<32x4xf32>, vector<8x4xf32> -> vector<8x4xf32>
    %c0_3 = arith.constant 0 : index
    %c0_4 = arith.constant 0 : index
    %3 = vector.load %arg3[%c0_3, %c0_4] : memref<1x4xf32, #tpu.memory_space<vmem>>, vector<1x4xf32>
    %4 = vector.broadcast %3 : vector<1x4xf32> to vector<8x4xf32>
    %5 = arith.addf %2, %4 : vector<8x4xf32>
    %c0_5 = arith.constant 0 : index
    %c0_6 = arith.constant 0 : index
    %6 = vector.load %arg4[%c0_5, %c0_6] : memref<8x4xf32, #tpu.memory_space<vmem>>, vector<8x4xf32>
    tpu.vector_store %arg4[%c0_5, %c0_6], %5 {strides = array<i32>} : memref<8x4xf32, #tpu.memory_space<vmem>>, vector<8x4xf32>,
    return
  }
  func.func @transform_0(%arg0: i32) -> (i32, i32) {
    %c0_i32 = arith.constant 0 : i32
    %c0_i32_0 = arith.constant 0 : i32
    return %arg0, %c0_i32 : i32, i32
  }
  func.func @transform_1(%arg0: i32) -> (i32, i32) {
    %c0_i32 = arith.constant 0 : i32
    %c0_i32_0 = arith.constant 0 : i32
    %c0_i32_1 = arith.constant 0 : i32
    return %c0_i32, %c0_i32_0 : i32, i32
  }
  func.func @transform_2(%arg0: i32) -> (i32, i32) {
    %c0_i32 = arith.constant 0 : i32
    %c0_i32_0 = arith.constant 0 : i32
    %c0_i32_1 = arith.constant 0 : i32
    return %c0_i32, %c0_i32_0 : i32, i32
  }
  func.func @transform_3(%arg0: i32) -> (i32, i32) {
    %c0_i32 = arith.constant 0 : i32
    %c0_i32_0 = arith.constant 0 : i32
    return %arg0, %c0_i32 : i32, i32
  }
}

</mosaic_0001>

<llo_original>
// kernel: tpu_custom_call.1
$region0: #{tpu_custom_call.1}
  #allocation0 [shape = 'u32[]', space=smem, size = 0x4, offset = 0x4, fixed_abs, tag = 'smem constant byte address 0x4 - core index']
  #allocation1 [shape = 'u32[144,128]{1,0:T(1,128)}', space=vmem, size = 0x12000, scoped, tag = 'internal scratch']
  %s0 = inlined_call_operand.vmem [shape: f32[8,32], index: 0, kind: input, shape index: {}]
  %s1 = inlined_call_operand.vmem [shape: f32[32,4], index: 1, kind: input, shape index: {}]
  %s2 = inlined_call_operand.vmem [shape: f32[1,4], index: 2, kind: input, shape index: {}]
  %s3 = inlined_call_operand.vmem [shape: f32[8,4], index: 3, kind: output, shape index: {}]
  %s4 = sld [smem:[#allocation0]]
  $region22: #{tpu_custom_call.1} parent=0
    _
  %s6 = ssub.s32 1, %s4
  %s7 = scalar_select 0, %s6, %s4
  // Predicated region
  $region2: #{tpu_custom_call.1} parent=0 // pred_check
    _
  $region3: #{tpu_custom_call.1} parent=0 // pred_check_branch
    %9 = sbr.rel (0) target = $region5
  $region4: #{tpu_custom_call.1} parent=0 // pred_region
    _
  $region5: #{tpu_custom_call.1} parent=0 // pred_fallthru
    _
  // Predicated region
  $region6: #{tpu_custom_call.1} parent=0 // pred_check
    _
  $region7: #{tpu_custom_call.1} parent=0 // pred_check_branch
    %11 = sbr.rel (0) target = $region9
  $region8: #{tpu_custom_call.1} parent=0 // pred_region
    _
  $region9: #{tpu_custom_call.1} parent=0 // pred_fallthru
    _
  // Predicated region
  $region10: #{tpu_custom_call.1} parent=0 // pred_check
    _
  $region11: #{tpu_custom_call.1} parent=0 // pred_check_branch
    %13 = sbr.rel (0) target = $region13
  $region12: #{tpu_custom_call.1} parent=0 // pred_region
    _
  $region13: #{tpu_custom_call.1} parent=0 // pred_fallthru
    _
  %v14 = vld [vmem:[%s0] sm:$0xff]
  %v15 = vld [vmem:[%s1] sm:$0xff]
  %v16 = vld [vmem:[%s1 + $0x8] sm:$0xff]
  %v17 = vld [vmem:[%s1 + $0x10] sm:$0xff]
  %v18 = vld [vmem:[%s1 + $0x18] sm:$0xff]
  %v19 = vld [vmem:[%s2] sm:$0x1]
  %v21 = vlaneseq
  %v22 = vshrl.u32 %v21, 7
  %v23 = vsub.s32 0, %v22
  %v24 = vrot.slane %v19, %v23
  %vm26 = vcmask 261120
  %v28 = vsel %vm26, %v14, 0
  %30 = vmatprep.subr.mxu0 0.0
  %31 = vmatpush1.msra.mxu0 0.0
  %32 = vmatprep.subr.mxu0 0.0
  %33 = vmatpush1.msra.mxu0 0.0
  %34 = vmatprep.subr.mxu0 0.0
  %35 = vmatpush1.msra.mxu0 0.0
  %36 = vmatprep.subr.mxu0 0.0
  %37 = vmatpush1.msra.mxu0 0.0
  %38 = vmatprep.subr.mxu0 0.0
  %39 = vmatpush1.msra.mxu0 0.0
  %40 = vmatprep.subr.mxu0 0.0
  %41 = vmatpush1.msra.mxu0 0.0
  %42 = vmatprep.subr.mxu0 0.0
  %43 = vmatpush1.msra.mxu0 0.0
  %44 = vmatprep.subr.mxu0 0.0
  %45 = vmatpush1.msra.mxu0 0.0
  %46 = vmatprep.subr.mxu0 0.0
  %47 = vmatpush1.msra.mxu0 0.0
  %48 = vmatprep.subr.mxu0 0.0
  %49 = vmatpush1.msra.mxu0 0.0
  %50 = vmatprep.subr.mxu0 0.0
  %51 = vmatpush1.msra.mxu0 0.0
  %52 = vmatprep.subr.mxu0 0.0
  %53 = vmatpush1.msra.mxu0 0.0
  %54 = vmatprep.subr.mxu0 0.0
  %55 = vmatpush1.msra.mxu0 %v18
  %56 = vmatprep.subr.mxu0 0.0
  %57 = vmatpush1.msra.mxu0 %v17
  %58 = vmatprep.subr.mxu0 0.0
  %59 = vmatpush1.msra.mxu0 %v16
  %60 = vmatprep.subr.mxu0 0.0
  %61 = vmatpush1.msra.mxu0 %v15
  %62 = vmatprep.subr.mxu0 0.0
  %63 = vmatpush2.msra.mxu0 0.0
  %64 = vmatprep.subr.mxu0 0.0
  %65 = vmatpush2.msra.mxu0 0.0
  %66 = vmatprep.subr.mxu0 0.0
  %67 = vmatpush2.msra.mxu0 0.0
  %68 = vmatprep.subr.mxu0 0.0
  %69 = vmatpush2.msra.mxu0 0.0
  %70 = vmatprep.subr.mxu0 0.0
  %71 = vmatpush2.msra.mxu0 0.0
  %72 = vmatprep.subr.mxu0 0.0
  %73 = vmatpush2.msra.mxu0 0.0
  %74 = vmatprep.subr.mxu0 0.0
  %75 = vmatpush2.msra.mxu0 0.0
  %76 = vmatprep.subr.mxu0 0.0
  %77 = vmatpush2.msra.mxu0 0.0
  %78 = vmatprep.subr.mxu0 0.0
  %79 = vmatpush2.msra.mxu0 0.0
  %80 = vmatprep.subr.mxu0 0.0
  %81 = vmatpush2.msra.mxu0 0.0
  %82 = vmatprep.subr.mxu0 0.0
  %83 = vmatpush2.msra.mxu0 0.0
  %84 = vmatprep.subr.mxu0 0.0
  %85 = vmatpush2.msra.mxu0 0.0
  %86 = vmatprep.subr.mxu0 0.0
  %87 = vmatpush2.msra.mxu0 0.0
  %88 = vmatprep.subr.mxu0 0.0
  %89 = vmatpush2.msra.mxu0 0.0
  %90 = vmatprep.subr.mxu0 0.0
  %91 = vmatpush2.msra.mxu0 0.0
  %92 = vmatprep.subr.mxu0 0.0
  %93 = vmatpush2.msra.mxu0 0.0
  %94 = vmatprep.mubr.f32.mxu0 0.0
  %95 = vmatmul.mubr.f32.gmra.mxu0 %v28
  %v96 = vpop.f32.mrf.mxu0
  %v97 = vadd.f32 %v24, %v96
  %v98 = vpop.f32.mrf.mxu0
  %99 = vdwg.mxu0
  %vm100 = vcmask 31744
  %101 = vst.msk [vmem:[%s3] sm:$0xff] %vm100, %v97
  // Predicated region
  $region14: #{tpu_custom_call.1} parent=0 // pred_check
    _
  $region15: #{tpu_custom_call.1} parent=0 // pred_check_branch
    %103 = sbr.rel (0) target = $region17
  $region16: #{tpu_custom_call.1} parent=0 // pred_region
    _
  $region17: #{tpu_custom_call.1} parent=0 // pred_fallthru
    _
  // Predicated region
  $region18: #{tpu_custom_call.1} parent=0 // pred_check
    _
  $region19: #{tpu_custom_call.1} parent=0 // pred_check_branch
    %105 = sbr.rel (0) target = $region21
  $region20: #{tpu_custom_call.1} parent=0 // pred_region
    _
  $region21: #{tpu_custom_call.1} parent=0 // pred_fallthru
    _

</llo_original>
